<compile_context>
chip_gen: v7x
topology: tpu7x:2x2x1
jax: 0.10.0
libtpu: 0.0.40
codegen_flags: <defaults>
</compile_context>

<pallas_src>
import numpy as np
import jax
import jax.numpy as jnp
from jax import lax
from jax.experimental import pallas as pl
from jax.experimental.pallas import tpu as pltpu


def _round_up(a: int, b: int) -> int:
    return -(-a // b) * b


def _pick_fold(n_rows: int, d: int) -> int:
    """Largest F with F*d <= 128 and F | n_rows (falls back to 1)."""
    if d >= 128 or n_rows <= 0:
        return 1
    for f in range(128 // d, 0, -1):
        if n_rows % f == 0:
            return f
    return 1


def _make_kernel(windows, compute_dtype):
    """windows: static tuple of (out_col, lane_start, lane_len)."""

    def kernel(x_ref, w_ref, c2_ref, out_ref):
        x = x_ref[...].astype(compute_dtype)                        # (rt, F*D)
        # Fused block-diagonal matmul:
        #   dist[r, f*Lsel + l] = ||c_l||^2 - 2 * x[row r*F+f] . c_l
        dist = jnp.dot(x, w_ref[...], preferred_element_type=jnp.float32)
        dist = dist + c2_ref[...]                                    # (rt, F*Lsel)
        for col, start, length in windows:
            win = dist[:, start:start + length]                      # (rt, L)
            mn = jnp.min(win, axis=-1, keepdims=True)                # (rt, 1)
            idx = lax.broadcasted_iota(jnp.int32, win.shape, 1).astype(jnp.float32)
            # first-index argmin, kept in the reduce's natural layout
            lab = jnp.min(jnp.where(win <= mn, idx, 1e9),
                          axis=-1, keepdims=True)                    # (rt, 1)
            out_ref[:, col:col + 1] = lab.astype(jnp.int32)

    return kernel


def _multi_kmeans_labels(x, centers, active, *, row_tile=4096,
                         compute_dtype=jnp.bfloat16):
    """Labels for the sub-labellers listed in `active` (tuple of slice idxs).

    x:        (..., D) array, D == sum of per-slice feature dims
    centers:  list of (L_s, d_s) cluster-center arrays
    returns:  (len(active), ...) int32 labels
    """
    slice_dims = tuple(int(c.shape[1]) for c in centers)
    D = sum(slice_dims)
    if x.shape[-1] != D:
        raise ValueError(f"x last dim {x.shape[-1]} != sum(slices) {D}")
    lead = x.shape[:-1]
    N = int(np.prod(lead)) if lead else 1
    A = len(active)
    if N == 0:
        return jnp.zeros((A, *lead), jnp.int32)

    labels_per = [int(centers[s].shape[0]) for s in active]
    Lsel = sum(labels_per)
    doffs = np.cumsum([0, *slice_dims])
    loffs = np.cumsum([0, *labels_per])

    # --- lane fold: (N, D) -> (Nf, F*D), free row-major reshape -------------
    F = _pick_fold(N, D)
    Nf = N // F
    FD = F * D
    xf = x.reshape(Nf, FD)

    # --- center tables: W = -2*C^T block-diag, replicated F-fold ------------
    Wu = jnp.zeros((D, Lsel), jnp.float32)
    c2u = jnp.zeros((1, Lsel), jnp.float32)
    for j, s in enumerate(active):
        c = centers[s].astype(jnp.float32)
        d0, l0, l1 = int(doffs[s]), int(loffs[j]), int(loffs[j + 1])
        Wu = Wu.at[d0:d0 + slice_dims[s], l0:l1].set(-2.0 * c.T)
        c2u = c2u.at[0, l0:l1].set(jnp.sum(c * c, axis=-1))
    W = jnp.kron(jnp.eye(F, dtype=jnp.float32), Wu).astype(compute_dtype)
    c2 = jnp.tile(c2u, (1, F))                                    # (1, F*Lsel)

    ncols = F * A
    windows = tuple((f * A + j, f * Lsel + int(loffs[j]), labels_per[j])
                    for f in range(F) for j in range(A))

    # --- row tile (folded rows): big slabs; keep >=2 grid steps for megacore
    rt_req = max(8, _round_up(int(row_tile), 8))
    half = _round_up(pl.cdiv(Nf, 2), 8)
    rt = min(rt_req, half) if half >= 1024 else min(rt_req, Nf)
    if rt >= Nf:
        rt = Nf                          # single full block (any size allowed)
    else:
        rt = max(8, (rt // 8) * 8)       # partial last block handled by Pallas
    grid = pl.cdiv(Nf, rt)

    kernel = _make_kernel(windows, compute_dtype)

    out = pl.pallas_call(
        kernel,
        out_shape=jax.ShapeDtypeStruct((Nf, ncols), jnp.int32),
        grid_spec=pltpu.PrefetchScalarGridSpec(
            num_scalar_prefetch=0,
            grid=(grid,),
            in_specs=[
                pl.BlockSpec((rt, FD), lambda i: (i, 0)),         # streamed rows
                pl.BlockSpec((FD, F * Lsel), lambda i: (0, 0)),   # resident W
                pl.BlockSpec((1, F * Lsel), lambda i: (0, 0)),    # resident c2
            ],
            out_specs=pl.BlockSpec((rt, ncols), lambda i: (i, 0)),
        ),
        compiler_params=pltpu.CompilerParams(
            dimension_semantics=("parallel",),
            # <= scoped defaults on v6e/v7x, raises v5e's 16 MiB default.
            vmem_limit_bytes=32 * 1024 * 1024,
        ),
    )(xf, W, c2)

    # De-interleave the fold: out[r, f*A + j] belongs to (row r*F+f, slice j).
    per = out.reshape(Nf, F, A).transpose(2, 0, 1).reshape(A, N)
    return per.reshape((A, *lead))


def multi_kmeans_per_slice_labels(x, centers, *, row_tile=4096,
                                  compute_dtype=jnp.bfloat16):
    """Per-slice k-means labels for every row: (num_slices, ...) int32."""
    return _multi_kmeans_labels(x, centers, tuple(range(len(centers))),
                                row_tile=row_tile, compute_dtype=compute_dtype)


def multi_kmeans_forward(x, centers, mask=None, *, row_tile=4096,
                         compute_dtype=jnp.bfloat16):
    """Equivalent of MultiKMeansLabeller.forward (mask optional).

    Fast path: only the LAST slice's centers are baked into the kernel, since
    the PyTorch forward() returns only the last sub-labeller's labels.
    """
    labels = _multi_kmeans_labels(x, centers, (len(centers) - 1,),
                                  row_tile=row_tile,
                                  compute_dtype=compute_dtype)[0]
    if mask is not None:
        # apply_mask + apply_unmask collapses to zeroing unmasked positions,
        # since labelling is independent per row.
        labels = jnp.where(mask, labels, jnp.zeros_like(labels))
    return labels


# TODO(synk): fit() (k-means training), probs_to_code()/probabilities_to_code()
# (multinomial sampling) and idx_to_code() (center gather) are not part of
# forward() and are intentionally not implemented as kernels.


if __name__ == "__main__":
    key = jax.random.PRNGKey(0)
    keys = jax.random.split(key, 8)

    # Module-consistent setup: inpt_dim = 32, slices = (8, 8, 16),
    # labels_per_slice = (4, 3, 5), input (batch=2, seq=8, inpt_dim=32).
    slices = (8, 8, 16)
    labels_per_slice = (4, 3, 5)
    D = sum(slices)
    centers = [jax.random.normal(k, (L, d), dtype=jnp.float32)
               for k, L, d in zip(keys[:3], labels_per_slice, slices)]

    def check_against_reference(x, labels, which, tol=1.5e-2):
        """The chosen center's true squared distance must be within a small
        relative tolerance of the row minimum (bf16 dot + expanded-form
        distances may flip near-ties, but never pick a clearly worse center)."""
        n = int(np.prod(x.shape[:-1]))
        xf = np.asarray(x, dtype=np.float32).reshape(n, D)
        doffs = np.cumsum([0, *slices])
        for lab_arr, s in zip(labels, which):
            cnp = np.asarray(centers[s], dtype=np.float32)
            L, d = cnp.shape
            xs = xf[:, doffs[s]:doffs[s] + d]
            d2 = ((xs[:, None, :] - cnp[None, :, :]) ** 2).sum(-1)   # (n, L)
            lab = np.asarray(lab_arr).reshape(n)
            assert lab.min() >= 0 and lab.max() < L, f"slice {s}: label range"
            chosen = d2[np.arange(n), lab]
            best = d2.min(axis=1)
            assert np.all(chosen <= best + tol * (1.0 + best)), \
                f"slice {s}: labels do not minimise distance"

    # 1) small case (fold F=4, single full block)
    x_small = jax.random.normal(keys[3], (2, 8, D), dtype=jnp.float32)
    per_slice = jax.block_until_ready(
        multi_kmeans_per_slice_labels(x_small, centers))
    assert per_slice.shape == (3, 2, 8) and per_slice.dtype == jnp.int32
    check_against_reference(x_small, per_slice, (0, 1, 2))

    fwd = jax.block_until_ready(multi_kmeans_forward(x_small, centers))
    assert fwd.shape == (2, 8) and fwd.dtype == jnp.int32
    check_against_reference(x_small, fwd[None], (2,))

    mask = jnp.broadcast_to(jnp.arange(8)[None, :] < 5, (2, 8))
    masked = jax.block_until_ready(
        multi_kmeans_forward(x_small, centers, mask))
    mask_np = np.asarray(mask)
    assert np.all(np.asarray(masked)[~mask_np] == 0)
    np.testing.assert_array_equal(np.asarray(masked)[mask_np],
                                  np.asarray(fwd)[mask_np])

    # 2) larger case: N=8192 -> F=4, Nf=2048; row_tile=512 gives a 4-step
    #    pipelined grid; forward() default tile is capped to keep >=2 steps.
    x_big = jax.random.normal(keys[4], (8, 1024, D), dtype=jnp.float32)
    per_big = jax.block_until_ready(
        multi_kmeans_per_slice_labels(x_big, centers, row_tile=512))
    check_against_reference(x_big, per_big, (0, 1, 2))
    fwd_big = jax.block_until_ready(multi_kmeans_forward(x_big, centers))
    check_against_reference(x_big, fwd_big[None], (2,))

    # 3) ragged folded grid: N=1500 -> F=4, Nf=375, rt=64 -> partial last block
    x_rag = jax.random.normal(keys[5], (3, 500, D), dtype=jnp.float32)
    per_rag = jax.block_until_ready(
        multi_kmeans_per_slice_labels(x_rag, centers, row_tile=64))
    check_against_reference(x_rag, per_rag, (0, 1, 2))

    # 4) N=45 -> fold F=3 (96-lane contraction), single full block
    x_odd = jax.random.normal(keys[6], (5, 9, D), dtype=jnp.float32)
    per_odd = jax.block_until_ready(
        multi_kmeans_per_slice_labels(x_odd, centers))
    assert per_odd.shape == (3, 5, 9)
    check_against_reference(x_odd, per_odd, (0, 1, 2))

    # 5) prime N=7 -> no fold (F=1), exercises the unfolded path
    x_p = jax.random.normal(keys[7], (7, D), dtype=jnp.float32)
    per_p = jax.block_until_ready(multi_kmeans_per_slice_labels(x_p, centers))
    assert per_p.shape == (3, 7)
    check_against_reference(x_p, per_p, (0, 1, 2))

    print("KERNEL_OK")
</pallas_src>

<mosaic_0001>
module attributes {stable_mosaic.version = 11 : i64} {
  func.func @kernel(%arg0: i32, %arg1: memref<4x128xf32, #tpu.memory_space<vmem>>, %arg2: memref<128x48xbf16, #tpu.memory_space<vmem>>, %arg3: memref<1x48xf32, #tpu.memory_space<vmem>>, %arg4: memref<4x12xi32, #tpu.memory_space<vmem>>) attributes {dimension_semantics = [#tpu.dimension_semantics<parallel>], iteration_bounds = array<i64: 1>, scalar_prefetch = 0 : i64, scratch_operands = 0 : i64, tpu.core_type = #tpu.core_type<tc>, window_params = [{transform_indices = @transform_0, window_bounds = array<i64: 4, 128>}, {pipeline_mode = #tpu.pipeline_mode<synchronous>, transform_indices = @transform_1, window_bounds = array<i64: 128, 48>}, {pipeline_mode = #tpu.pipeline_mode<synchronous>, transform_indices = @transform_2, window_bounds = array<i64: 1, 48>}, {transform_indices = @transform_3, window_bounds = array<i64: 4, 12>}]} {
    %c0 = arith.constant 0 : index
    %c0_0 = arith.constant 0 : index
    %0 = vector.load %arg1[%c0, %c0_0] : memref<4x128xf32, #tpu.memory_space<vmem>>, vector<4x128xf32>
    %1 = arith.truncf %0 : vector<4x128xf32> to vector<4x128xbf16>
    %c0_1 = arith.constant 0 : index
    %c0_2 = arith.constant 0 : index
    %2 = vector.load %arg2[%c0_1, %c0_2] : memref<128x48xbf16, #tpu.memory_space<vmem>>, vector<128x48xbf16>
    %cst = arith.constant dense<0.000000e+00> : vector<4x48xf32>
    %3 = tpu.matmul %1, %2, %cst {dimension_numbers = #tpu.dot_dimension_numbers<[1], [0], [0], [1], [0, 0, 1, 1], [], []>} : vector<4x128xbf16>, vector<128x48xbf16>, vector<4x48xf32> -> vector<4x48xf32>
    %c0_3 = arith.constant 0 : index
    %c0_4 = arith.constant 0 : index
    %4 = vector.load %arg3[%c0_3, %c0_4] : memref<1x48xf32, #tpu.memory_space<vmem>>, vector<1x48xf32>
    %5 = vector.broadcast %4 : vector<1x48xf32> to vector<4x48xf32>
    %6 = arith.addf %3, %5 : vector<4x48xf32>
    %7 = vector.extract_strided_slice %6 {offsets = [0, 0], sizes = [4, 4], strides = [1, 1]} : vector<4x48xf32> to vector<4x4xf32>
    %cst_5 = arith.constant dense<0x7F800000> : vector<4xf32>
    %8 = vector.multi_reduction <minimumf>, %7, %cst_5 [1] : vector<4x4xf32> to vector<4xf32>
    %9 = vector.shape_cast %8 : vector<4xf32> to vector<4x1xf32>
    %10 = tpu.iota {dimensions = array<i32: 1>} : vector<4x4xi32>
    %11 = arith.sitofp %10 : vector<4x4xi32> to vector<4x4xf32>
    %12 = vector.broadcast %9 : vector<4x1xf32> to vector<4x4xf32>
    %13 = arith.cmpf ole, %7, %12 : vector<4x4xf32>
    %cst_6 = arith.constant 1.000000e+09 : f32
    %14 = vector.broadcast %cst_6 : f32 to vector<4x4xf32>
    %15 = arith.select %13, %11, %14 : vector<4x4xi1>, vector<4x4xf32>
    %cst_7 = arith.constant dense<0x7F800000> : vector<4xf32>
    %16 = vector.multi_reduction <minimumf>, %15, %cst_7 [1] : vector<4x4xf32> to vector<4xf32>
    %17 = vector.shape_cast %16 : vector<4xf32> to vector<4x1xf32>
    %18 = arith.fptosi %17 : vector<4x1xf32> to vector<4x1xi32>
    %c0_8 = arith.constant 0 : index
    %c0_9 = arith.constant 0 : index
    %19 = vector.load %arg4[%c0_8, %c0_9] : memref<4x12xi32, #tpu.memory_space<vmem>>, vector<4x1xi32>
    tpu.vector_store %arg4[%c0_8, %c0_9], %18 {strides = array<i32>} : memref<4x12xi32, #tpu.memory_space<vmem>>, vector<4x1xi32>,
    %20 = vector.extract_strided_slice %6 {offsets = [0, 4], sizes = [4, 3], strides = [1, 1]} : vector<4x48xf32> to vector<4x3xf32>
    %cst_10 = arith.constant dense<0x7F800000> : vector<4xf32>
    %21 = vector.multi_reduction <minimumf>, %20, %cst_10 [1] : vector<4x3xf32> to vector<4xf32>
    %22 = vector.shape_cast %21 : vector<4xf32> to vector<4x1xf32>
    %23 = tpu.iota {dimensions = array<i32: 1>} : vector<4x3xi32>
    %24 = arith.sitofp %23 : vector<4x3xi32> to vector<4x3xf32>
    %25 = vector.broadcast %22 : vector<4x1xf32> to vector<4x3xf32>
    %26 = arith.cmpf ole, %20, %25 : vector<4x3xf32>
    %cst_11 = arith.constant 1.000000e+09 : f32
    %27 = vector.broadcast %cst_11 : f32 to vector<4x3xf32>
    %28 = arith.select %26, %24, %27 : vector<4x3xi1>, vector<4x3xf32>
    %cst_12 = arith.constant dense<0x7F800000> : vector<4xf32>
    %29 = vector.multi_reduction <minimumf>, %28, %cst_12 [1] : vector<4x3xf32> to vector<4xf32>
    %30 = vector.shape_cast %29 : vector<4xf32> to vector<4x1xf32>
    %31 = arith.fptosi %30 : vector<4x1xf32> to vector<4x1xi32>
    %c0_13 = arith.constant 0 : index
    %c1 = arith.constant 1 : index
    %32 = vector.load %arg4[%c0_13, %c1] : memref<4x12xi32, #tpu.memory_space<vmem>>, vector<4x1xi32>
    tpu.vector_store %arg4[%c0_13, %c1], %31 {strides = array<i32>} : memref<4x12xi32, #tpu.memory_space<vmem>>, vector<4x1xi32>,
    %33 = vector.extract_strided_slice %6 {offsets = [0, 7], sizes = [4, 5], strides = [1, 1]} : vector<4x48xf32> to vector<4x5xf32>
    %cst_14 = arith.constant dense<0x7F800000> : vector<4xf32>
    %34 = vector.multi_reduction <minimumf>, %33, %cst_14 [1] : vector<4x5xf32> to vector<4xf32>
    %35 = vector.shape_cast %34 : vector<4xf32> to vector<4x1xf32>
    %36 = tpu.iota {dimensions = array<i32: 1>} : vector<4x5xi32>
    %37 = arith.sitofp %36 : vector<4x5xi32> to vector<4x5xf32>
    %38 = vector.broadcast %35 : vector<4x1xf32> to vector<4x5xf32>
    %39 = arith.cmpf ole, %33, %38 : vector<4x5xf32>
    %cst_15 = arith.constant 1.000000e+09 : f32
    %40 = vector.broadcast %cst_15 : f32 to vector<4x5xf32>
    %41 = arith.select %39, %37, %40 : vector<4x5xi1>, vector<4x5xf32>
    %cst_16 = arith.constant dense<0x7F800000> : vector<4xf32>
    %42 = vector.multi_reduction <minimumf>, %41, %cst_16 [1] : vector<4x5xf32> to vector<4xf32>
    %43 = vector.shape_cast %42 : vector<4xf32> to vector<4x1xf32>
    %44 = arith.fptosi %43 : vector<4x1xf32> to vector<4x1xi32>
    %c0_17 = arith.constant 0 : index
    %c2 = arith.constant 2 : index
    %45 = vector.load %arg4[%c0_17, %c2] : memref<4x12xi32, #tpu.memory_space<vmem>>, vector<4x1xi32>
    tpu.vector_store %arg4[%c0_17, %c2], %44 {strides = array<i32>} : memref<4x12xi32, #tpu.memory_space<vmem>>, vector<4x1xi32>,
    %46 = vector.extract_strided_slice %6 {offsets = [0, 12], sizes = [4, 4], strides = [1, 1]} : vector<4x48xf32> to vector<4x4xf32>
    %cst_18 = arith.constant dense<0x7F800000> : vector<4xf32>
    %47 = vector.multi_reduction <minimumf>, %46, %cst_18 [1] : vector<4x4xf32> to vector<4xf32>
    %48 = vector.shape_cast %47 : vector<4xf32> to vector<4x1xf32>
    %49 = tpu.iota {dimensions = array<i32: 1>} : vector<4x4xi32>
    %50 = arith.sitofp %49 : vector<4x4xi32> to vector<4x4xf32>
    %51 = vector.broadcast %48 : vector<4x1xf32> to vector<4x4xf32>
    %52 = arith.cmpf ole, %46, %51 : vector<4x4xf32>
    %cst_19 = arith.constant 1.000000e+09 : f32
    %53 = vector.broadcast %cst_19 : f32 to vector<4x4xf32>
    %54 = arith.select %52, %50, %53 : vector<4x4xi1>, vector<4x4xf32>
    %cst_20 = arith.constant dense<0x7F800000> : vector<4xf32>
    %55 = vector.multi_reduction <minimumf>, %54, %cst_20 [1] : vector<4x4xf32> to vector<4xf32>
    %56 = vector.shape_cast %55 : vector<4xf32> to vector<4x1xf32>
    %57 = arith.fptosi %56 : vector<4x1xf32> to vector<4x1xi32>
    %c0_21 = arith.constant 0 : index
    %c3 = arith.constant 3 : index
    %58 = vector.load %arg4[%c0_21, %c3] : memref<4x12xi32, #tpu.memory_space<vmem>>, vector<4x1xi32>
    tpu.vector_store %arg4[%c0_21, %c3], %57 {strides = array<i32>} : memref<4x12xi32, #tpu.memory_space<vmem>>, vector<4x1xi32>,
    %59 = vector.extract_strided_slice %6 {offsets = [0, 16], sizes = [4, 3], strides = [1, 1]} : vector<4x48xf32> to vector<4x3xf32>
    %cst_22 = arith.constant dense<0x7F800000> : vector<4xf32>
    %60 = vector.multi_reduction <minimumf>, %59, %cst_22 [1] : vector<4x3xf32> to vector<4xf32>
    %61 = vector.shape_cast %60 : vector<4xf32> to vector<4x1xf32>
    %62 = tpu.iota {dimensions = array<i32: 1>} : vector<4x3xi32>
    %63 = arith.sitofp %62 : vector<4x3xi32> to vector<4x3xf32>
    %64 = vector.broadcast %61 : vector<4x1xf32> to vector<4x3xf32>
    %65 = arith.cmpf ole, %59, %64 : vector<4x3xf32>
    %cst_23 = arith.constant 1.000000e+09 : f32
    %66 = vector.broadcast %cst_23 : f32 to vector<4x3xf32>
    %67 = arith.select %65, %63, %66 : vector<4x3xi1>, vector<4x3xf32>
    %cst_24 = arith.constant dense<0x7F800000> : vector<4xf32>
    %68 = vector.multi_reduction <minimumf>, %67, %cst_24 [1] : vector<4x3xf32> to vector<4xf32>
    %69 = vector.shape_cast %68 : vector<4xf32> to vector<4x1xf32>
    %70 = arith.fptosi %69 : vector<4x1xf32> to vector<4x1xi32>
    %c0_25 = arith.constant 0 : index
    %c4 = arith.constant 4 : index
    %71 = vector.load %arg4[%c0_25, %c4] : memref<4x12xi32, #tpu.memory_space<vmem>>, vector<4x1xi32>
    tpu.vector_store %arg4[%c0_25, %c4], %70 {strides = array<i32>} : memref<4x12xi32, #tpu.memory_space<vmem>>, vector<4x1xi32>,
    %72 = vector.extract_strided_slice %6 {offsets = [0, 19], sizes = [4, 5], strides = [1, 1]} : vector<4x48xf32> to vector<4x5xf32>
    %cst_26 = arith.constant dense<0x7F800000> : vector<4xf32>
    %73 = vector.multi_reduction <minimumf>, %72, %cst_26 [1] : vector<4x5xf32> to vector<4xf32>
    %74 = vector.shape_cast %73 : vector<4xf32> to vector<4x1xf32>
    %75 = tpu.iota {dimensions = array<i32: 1>} : vector<4x5xi32>
    %76 = arith.sitofp %75 : vector<4x5xi32> to vector<4x5xf32>
    %77 = vector.broadcast %74 : vector<4x1xf32> to vector<4x5xf32>
    %78 = arith.cmpf ole, %72, %77 : vector<4x5xf32>
    %cst_27 = arith.constant 1.000000e+09 : f32
    %79 = vector.broadcast %cst_27 : f32 to vector<4x5xf32>
    %80 = arith.select %78, %76, %79 : vector<4x5xi1>, vector<4x5xf32>
    %cst_28 = arith.constant dense<0x7F800000> : vector<4xf32>
    %81 = vector.multi_reduction <minimumf>, %80, %cst_28 [1] : vector<4x5xf32> to vector<4xf32>
    %82 = vector.shape_cast %81 : vector<4xf32> to vector<4x1xf32>
    %83 = arith.fptosi %82 : vector<4x1xf32> to vector<4x1xi32>
    %c0_29 = arith.constant 0 : index
    %c5 = arith.constant 5 : index
    %84 = vector.load %arg4[%c0_29, %c5] : memref<4x12xi32, #tpu.memory_space<vmem>>, vector<4x1xi32>
    tpu.vector_store %arg4[%c0_29, %c5], %83 {strides = array<i32>} : memref<4x12xi32, #tpu.memory_space<vmem>>, vector<4x1xi32>,
    %85 = vector.extract_strided_slice %6 {offsets = [0, 24], sizes = [4, 4], strides = [1, 1]} : vector<4x48xf32> to vector<4x4xf32>
    %cst_30 = arith.constant dense<0x7F800000> : vector<4xf32>
    %86 = vector.multi_reduction <minimumf>, %85, %cst_30 [1] : vector<4x4xf32> to vector<4xf32>
    %87 = vector.shape_cast %86 : vector<4xf32> to vector<4x1xf32>
    %88 = tpu.iota {dimensions = array<i32: 1>} : vector<4x4xi32>
    %89 = arith.sitofp %88 : vector<4x4xi32> to vector<4x4xf32>
    %90 = vector.broadcast %87 : vector<4x1xf32> to vector<4x4xf32>
    %91 = arith.cmpf ole, %85, %90 : vector<4x4xf32>
    %cst_31 = arith.constant 1.000000e+09 : f32
    %92 = vector.broadcast %cst_31 : f32 to vector<4x4xf32>
    %93 = arith.select %91, %89, %92 : vector<4x4xi1>, vector<4x4xf32>
    %cst_32 = arith.constant dense<0x7F800000> : vector<4xf32>
    %94 = vector.multi_reduction <minimumf>, %93, %cst_32 [1] : vector<4x4xf32> to vector<4xf32>
    %95 = vector.shape_cast %94 : vector<4xf32> to vector<4x1xf32>
    %96 = arith.fptosi %95 : vector<4x1xf32> to vector<4x1xi32>
    %c0_33 = arith.constant 0 : index
    %c6 = arith.constant 6 : index
    %97 = vector.load %arg4[%c0_33, %c6] : memref<4x12xi32, #tpu.memory_space<vmem>>, vector<4x1xi32>
    tpu.vector_store %arg4[%c0_33, %c6], %96 {strides = array<i32>} : memref<4x12xi32, #tpu.memory_space<vmem>>, vector<4x1xi32>,
    %98 = vector.extract_strided_slice %6 {offsets = [0, 28], sizes = [4, 3], strides = [1, 1]} : vector<4x48xf32> to vector<4x3xf32>
    %cst_34 = arith.constant dense<0x7F800000> : vector<4xf32>
    %99 = vector.multi_reduction <minimumf>, %98, %cst_34 [1] : vector<4x3xf32> to vector<4xf32>
    %100 = vector.shape_cast %99 : vector<4xf32> to vector<4x1xf32>
    %101 = tpu.iota {dimensions = array<i32: 1>} : vector<4x3xi32>
    %102 = arith.sitofp %101 : vector<4x3xi32> to vector<4x3xf32>
    %103 = vector.broadcast %100 : vector<4x1xf32> to vector<4x3xf32>
    %104 = arith.cmpf ole, %98, %103 : vector<4x3xf32>
    %cst_35 = arith.constant 1.000000e+09 : f32
    %105 = vector.broadcast %cst_35 : f32 to vector<4x3xf32>
    %106 = arith.select %104, %102, %105 : vector<4x3xi1>, vector<4x3xf32>
    %cst_36 = arith.constant dense<0x7F800000> : vector<4xf32>
    %107 = vector.multi_reduction <minimumf>, %106, %cst_36 [1] : vector<4x3xf32> to vector<4xf32>
    %108 = vector.shape_cast %107 : vector<4xf32> to vector<4x1xf32>
    %109 = arith.fptosi %108 : vector<4x1xf32> to vector<4x1xi32>
    %c0_37 = arith.constant 0 : index
    %c7 = arith.constant 7 : index
    %110 = vector.load %arg4[%c0_37, %c7] : memref<4x12xi32, #tpu.memory_space<vmem>>, vector<4x1xi32>
    tpu.vector_store %arg4[%c0_37, %c7], %109 {strides = array<i32>} : memref<4x12xi32, #tpu.memory_space<vmem>>, vector<4x1xi32>,
    %111 = vector.extract_strided_slice %6 {offsets = [0, 31], sizes = [4, 5], strides = [1, 1]} : vector<4x48xf32> to vector<4x5xf32>
    %cst_38 = arith.constant dense<0x7F800000> : vector<4xf32>
    %112 = vector.multi_reduction <minimumf>, %111, %cst_38 [1] : vector<4x5xf32> to vector<4xf32>
    %113 = vector.shape_cast %112 : vector<4xf32> to vector<4x1xf32>
    %114 = tpu.iota {dimensions = array<i32: 1>} : vector<4x5xi32>
    %115 = arith.sitofp %114 : vector<4x5xi32> to vector<4x5xf32>
    %116 = vector.broadcast %113 : vector<4x1xf32> to vector<4x5xf32>
    %117 = arith.cmpf ole, %111, %116 : vector<4x5xf32>
    %cst_39 = arith.constant 1.000000e+09 : f32
    %118 = vector.broadcast %cst_39 : f32 to vector<4x5xf32>
    %119 = arith.select %117, %115, %118 : vector<4x5xi1>, vector<4x5xf32>
    %cst_40 = arith.constant dense<0x7F800000> : vector<4xf32>
    %120 = vector.multi_reduction <minimumf>, %119, %cst_40 [1] : vector<4x5xf32> to vector<4xf32>
    %121 = vector.shape_cast %120 : vector<4xf32> to vector<4x1xf32>
    %122 = arith.fptosi %121 : vector<4x1xf32> to vector<4x1xi32>
    %c0_41 = arith.constant 0 : index
    %c8 = arith.constant 8 : index
    %123 = vector.load %arg4[%c0_41, %c8] : memref<4x12xi32, #tpu.memory_space<vmem>>, vector<4x1xi32>
    tpu.vector_store %arg4[%c0_41, %c8], %122 {strides = array<i32>} : memref<4x12xi32, #tpu.memory_space<vmem>>, vector<4x1xi32>,
    %124 = vector.extract_strided_slice %6 {offsets = [0, 36], sizes = [4, 4], strides = [1, 1]} : vector<4x48xf32> to vector<4x4xf32>
    %cst_42 = arith.constant dense<0x7F800000> : vector<4xf32>
    %125 = vector.multi_reduction <minimumf>, %124, %cst_42 [1] : vector<4x4xf32> to vector<4xf32>
    %126 = vector.shape_cast %125 : vector<4xf32> to vector<4x1xf32>
    %127 = tpu.iota {dimensions = array<i32: 1>} : vector<4x4xi32>
    %128 = arith.sitofp %127 : vector<4x4xi32> to vector<4x4xf32>
    %129 = vector.broadcast %126 : vector<4x1xf32> to vector<4x4xf32>
    %130 = arith.cmpf ole, %124, %129 : vector<4x4xf32>
    %cst_43 = arith.constant 1.000000e+09 : f32
    %131 = vector.broadcast %cst_43 : f32 to vector<4x4xf32>
    %132 = arith.select %130, %128, %131 : vector<4x4xi1>, vector<4x4xf32>
    %cst_44 = arith.constant dense<0x7F800000> : vector<4xf32>
    %133 = vector.multi_reduction <minimumf>, %132, %cst_44 [1] : vector<4x4xf32> to vector<4xf32>
    %134 = vector.shape_cast %133 : vector<4xf32> to vector<4x1xf32>
    %135 = arith.fptosi %134 : vector<4x1xf32> to vector<4x1xi32>
    %c0_45 = arith.constant 0 : index
    %c9 = arith.constant 9 : index
    %136 = vector.load %arg4[%c0_45, %c9] : memref<4x12xi32, #tpu.memory_space<vmem>>, vector<4x1xi32>
    tpu.vector_store %arg4[%c0_45, %c9], %135 {strides = array<i32>} : memref<4x12xi32, #tpu.memory_space<vmem>>, vector<4x1xi32>,
    %137 = vector.extract_strided_slice %6 {offsets = [0, 40], sizes = [4, 3], strides = [1, 1]} : vector<4x48xf32> to vector<4x3xf32>
    %cst_46 = arith.constant dense<0x7F800000> : vector<4xf32>
    %138 = vector.multi_reduction <minimumf>, %137, %cst_46 [1] : vector<4x3xf32> to vector<4xf32>
    %139 = vector.shape_cast %138 : vector<4xf32> to vector<4x1xf32>
    %140 = tpu.iota {dimensions = array<i32: 1>} : vector<4x3xi32>
    %141 = arith.sitofp %140 : vector<4x3xi32> to vector<4x3xf32>
    %142 = vector.broadcast %139 : vector<4x1xf32> to vector<4x3xf32>
    %143 = arith.cmpf ole, %137, %142 : vector<4x3xf32>
    %cst_47 = arith.constant 1.000000e+09 : f32
    %144 = vector.broadcast %cst_47 : f32 to vector<4x3xf32>
    %145 = arith.select %143, %141, %144 : vector<4x3xi1>, vector<4x3xf32>
    %cst_48 = arith.constant dense<0x7F800000> : vector<4xf32>
    %146 = vector.multi_reduction <minimumf>, %145, %cst_48 [1] : vector<4x3xf32> to vector<4xf32>
    %147 = vector.shape_cast %146 : vector<4xf32> to vector<4x1xf32>
    %148 = arith.fptosi %147 : vector<4x1xf32> to vector<4x1xi32>
    %c0_49 = arith.constant 0 : index
    %c10 = arith.constant 10 : index
    %149 = vector.load %arg4[%c0_49, %c10] : memref<4x12xi32, #tpu.memory_space<vmem>>, vector<4x1xi32>
    tpu.vector_store %arg4[%c0_49, %c10], %148 {strides = array<i32>} : memref<4x12xi32, #tpu.memory_space<vmem>>, vector<4x1xi32>,
    %150 = vector.extract_strided_slice %6 {offsets = [0, 43], sizes = [4, 5], strides = [1, 1]} : vector<4x48xf32> to vector<4x5xf32>
    %cst_50 = arith.constant dense<0x7F800000> : vector<4xf32>
    %151 = vector.multi_reduction <minimumf>, %150, %cst_50 [1] : vector<4x5xf32> to vector<4xf32>
    %152 = vector.shape_cast %151 : vector<4xf32> to vector<4x1xf32>
    %153 = tpu.iota {dimensions = array<i32: 1>} : vector<4x5xi32>
    %154 = arith.sitofp %153 : vector<4x5xi32> to vector<4x5xf32>
    %155 = vector.broadcast %152 : vector<4x1xf32> to vector<4x5xf32>
    %156 = arith.cmpf ole, %150, %155 : vector<4x5xf32>
    %cst_51 = arith.constant 1.000000e+09 : f32
    %157 = vector.broadcast %cst_51 : f32 to vector<4x5xf32>
    %158 = arith.select %156, %154, %157 : vector<4x5xi1>, vector<4x5xf32>
    %cst_52 = arith.constant dense<0x7F800000> : vector<4xf32>
    %159 = vector.multi_reduction <minimumf>, %158, %cst_52 [1] : vector<4x5xf32> to vector<4xf32>
    %160 = vector.shape_cast %159 : vector<4xf32> to vector<4x1xf32>
    %161 = arith.fptosi %160 : vector<4x1xf32> to vector<4x1xi32>
    %c0_53 = arith.constant 0 : index
    %c11 = arith.constant 11 : index
    %162 = vector.load %arg4[%c0_53, %c11] : memref<4x12xi32, #tpu.memory_space<vmem>>, vector<4x1xi32>
    tpu.vector_store %arg4[%c0_53, %c11], %161 {strides = array<i32>} : memref<4x12xi32, #tpu.memory_space<vmem>>, vector<4x1xi32>,
    return
  }
  func.func @transform_0(%arg0: i32) -> (i32, i32) {
    %c0_i32 = arith.constant 0 : i32
    %c0_i32_0 = arith.constant 0 : i32
    return %arg0, %c0_i32 : i32, i32
  }
  func.func @transform_1(%arg0: i32) -> (i32, i32) {
    %c0_i32 = arith.constant 0 : i32
    %c0_i32_0 = arith.constant 0 : i32
    %c0_i32_1 = arith.constant 0 : i32
    return %c0_i32, %c0_i32_0 : i32, i32
  }
  func.func @transform_2(%arg0: i32) -> (i32, i32) {
    %c0_i32 = arith.constant 0 : i32
    %c0_i32_0 = arith.constant 0 : i32
    %c0_i32_1 = arith.constant 0 : i32
    return %c0_i32, %c0_i32_0 : i32, i32
  }
  func.func @transform_3(%arg0: i32) -> (i32, i32) {
    %c0_i32 = arith.constant 0 : i32
    %c0_i32_0 = arith.constant 0 : i32
    return %arg0, %c0_i32 : i32, i32
  }
}

</mosaic_0001>

<llo_original>
// kernel: tpu_custom_call.1
$region0: #{tpu_custom_call.1}
  #allocation0 [shape = 'u32[]', space=smem, size = 0x4, offset = 0x4, fixed_abs, tag = 'smem constant byte address 0x4 - core index']
  #allocation1 [shape = 'u32[144,128]{1,0:T(1,128)}', space=vmem, size = 0x12000, scoped, tag = 'internal scratch']
  %s0 = inlined_call_operand.vmem [shape: f32[4,128], index: 0, kind: input, shape index: {}]
  %s1 = inlined_call_operand.vmem [shape: bf16[128,48], index: 1, kind: input, shape index: {}]
  %s2 = inlined_call_operand.vmem [shape: f32[1,48], index: 2, kind: input, shape index: {}]
  %s3 = inlined_call_operand.hbm [shape: s32[4,12], index: 3, kind: output, shape index: {}]
  %s4 = sld [smem:[#allocation0]]
  $region22: #{tpu_custom_call.1} parent=0
    _
  %s6 = ssub.s32 1, %s4
  %s7 = scalar_select 0, %s6, %s4
  $region1: #{tpu_custom_call.1} parent=0
    #allocation2 [shape = 'u8[2048]{0}', space=vmem, size = 0x800, scoped, tag = 'output window, operand 0, single buffered']
    #allocation3 [shape = 's32[1]{0}', space=sflag, size = 0x4, scoped, tag = 'scoped memory for tpu_custom_call.1']
    %8 = vsyncpa [#allocation3], 0
    // Predicated region
    $region2: #{tpu_custom_call.1} parent=1 // pred_check
      _
    $region3: #{tpu_custom_call.1} parent=1 // pred_check_branch
      %10 = sbr.rel (0) target = $region5
    $region4: #{tpu_custom_call.1} parent=1 // pred_region
      _
    $region5: #{tpu_custom_call.1} parent=1 // pred_fallthru
      _
    // Predicated region
    $region6: #{tpu_custom_call.1} parent=1 // pred_check
      _
    $region7: #{tpu_custom_call.1} parent=1 // pred_check_branch
      %12 = sbr.rel (0) target = $region9
    $region8: #{tpu_custom_call.1} parent=1 // pred_region
      _
    $region9: #{tpu_custom_call.1} parent=1 // pred_fallthru
      _
    // Predicated region
    $region10: #{tpu_custom_call.1} parent=1 // pred_check
      _
    $region11: #{tpu_custom_call.1} parent=1 // pred_check_branch
      %14 = sbr.rel (0) target = $region13
    $region12: #{tpu_custom_call.1} parent=1 // pred_region
      _
    $region13: #{tpu_custom_call.1} parent=1 // pred_fallthru
      _
    %v16 = vld [vmem:[%s0] sm:$0xf]
    %v17 = vpack.c.bf16 %v16, %v16
    %v18 = vld [vmem:[%s1] sm:$0xf]
    %v19 = vld [vmem:[%s1 + $0x4] sm:$0xf]
    %v20 = vld [vmem:[%s1 + $0x8] sm:$0xf]
    %v21 = vld [vmem:[%s1 + $0xc] sm:$0xf]
    %v22 = vld [vmem:[%s1 + $0x10] sm:$0xf]
    %v23 = vld [vmem:[%s1 + $0x14] sm:$0xf]
    %v24 = vld [vmem:[%s1 + $0x18] sm:$0xf]
    %v25 = vld [vmem:[%s1 + $0x1c] sm:$0xf]
    %v26 = vld [vmem:[%s1 + $0x20] sm:$0xf]
    %v27 = vld [vmem:[%s1 + $0x24] sm:$0xf]
    %v28 = vld [vmem:[%s1 + $0x28] sm:$0xf]
    %v29 = vld [vmem:[%s1 + $0x2c] sm:$0xf]
    %v30 = vld [vmem:[%s1 + $0x30] sm:$0xf]
    %v31 = vld [vmem:[%s1 + $0x34] sm:$0xf]
    %v32 = vld [vmem:[%s1 + $0x38] sm:$0xf]
    %v33 = vld [vmem:[%s1 + $0x3c] sm:$0xf]
    %v34 = vld [vmem:[%s2] sm:$0x1]
    %v36 = vlaneseq
    %v37 = vshrl.u32 %v36, 7
    %v38 = vsub.s32 0, %v37
    %v39 = vrot.slane %v34, %v38
    %v57 = vunpack.c.l.b16 %v18
    %v58 = vunpack.c.l.b16 %v19
    %v59 = vunpack.c.l.b16 %v20
    %v60 = vunpack.c.l.b16 %v21
    %v61 = vunpack.c.l.b16 %v22
    %v62 = vunpack.c.l.b16 %v23
    %v63 = vunpack.c.l.b16 %v24
    %v64 = vunpack.c.l.b16 %v25
    %v65 = vunpack.c.l.b16 %v26
    %v66 = vunpack.c.l.b16 %v27
    %v67 = vunpack.c.l.b16 %v28
    %v68 = vunpack.c.l.b16 %v29
    %v69 = vunpack.c.l.b16 %v30
    %v70 = vunpack.c.l.b16 %v31
    %v71 = vunpack.c.l.b16 %v32
    %v72 = vunpack.c.l.b16 %v33
    %v73 = vpack.c.b16 %v58, %v57
    %v74 = vpack.c.b16 %v60, %v59
    %v75 = vpack.c.b16 %v62, %v61
    %v76 = vpack.c.b16 %v64, %v63
    %v77 = vpack.c.b16 %v66, %v65
    %v78 = vpack.c.b16 %v68, %v67
    %v79 = vpack.c.b16 %v70, %v69
    %v80 = vpack.c.b16 %v72, %v71
    %89 = vmatprep.subr.bf16.mxu0 0
    %90 = vmatpush1.bf16.msra.mxu0 %v73
    %91 = vmatprep.subr.bf16.mxu0 0
    %92 = vmatpush1.bf16.msra.mxu0 %v74
    %93 = vmatprep.subr.bf16.mxu0 0
    %94 = vmatpush1.bf16.msra.mxu0 %v75
    %95 = vmatprep.subr.bf16.mxu0 0
    %96 = vmatpush1.bf16.msra.mxu0 %v76
    %97 = vmatprep.subr.bf16.mxu0 0
    %98 = vmatpush1.bf16.msra.mxu0 %v77
    %99 = vmatprep.subr.bf16.mxu0 0
    %100 = vmatpush1.bf16.msra.mxu0 %v78
    %101 = vmatprep.subr.bf16.mxu0 0
    %102 = vmatpush1.bf16.msra.mxu0 %v79
    %103 = vmatprep.subr.bf16.mxu0 0
    %104 = vmatpush1.bf16.msra.mxu0 %v80
    %105 = vmatprep.subr.bf16.mxu0 0
    %106 = vmatpush1.bf16.msra.mxu0 0
    %107 = vmatprep.subr.bf16.mxu0 0
    %108 = vmatpush1.bf16.msra.mxu0 0
    %109 = vmatprep.subr.bf16.mxu0 0
    %110 = vmatpush1.bf16.msra.mxu0 0
    %111 = vmatprep.subr.bf16.mxu0 0
    %112 = vmatpush1.bf16.msra.mxu0 0
    %113 = vmatprep.subr.bf16.mxu0 0
    %114 = vmatpush1.bf16.msra.mxu0 0
    %115 = vmatprep.subr.bf16.mxu0 0
    %116 = vmatpush1.bf16.msra.mxu0 0
    %117 = vmatprep.subr.bf16.mxu0 0
    %118 = vmatpush1.bf16.msra.mxu0 0
    %119 = vmatprep.subr.bf16.mxu0 0
    %120 = vmatpush1.bf16.msra.mxu0 0
    %121 = vmatprep.mubr.bf16.mxu0 0
    %122 = vmatmul.mubr.bf16.gmra.mrb[0].mxu0 %v17
    %v123 = vpop.f32.mrb[0].mxu0
    %v124 = vadd.f32 %v39, %v123
    %v125 = vpop.f32.mrb[0].mxu0
    %v126 = vpop.f32.mrb[0].mxu0
    %v127 = vpop.f32.mrb[0].mxu0
    %128 = vdwg.mxu0
    %vm129 = vcmask 27648
    %v130 = vsel %vm129, %v124, inf
    %131 = vmin.xlane.f32.xlu0 %v130
    %v132 = vpop.xlane.xlu0 %131
    %v133 = vlaneseq
    %v134 = vand.u32 %v133, 127
    %v135 = vcvt.s32.f32 %v134
    %vm136 = vcmp.le.f32.partialorder %v124, %v132
    %v137 = vsel %vm136, %v135, 1e+09
    %v138 = vsel %vm129, %v137, inf
    %139 = vmin.xlane.f32.xlu0 %v138
    %v140 = vpop.xlane.xlu0 %139
    %v141 = vcvt.f32.s32.to.zero.pseudo %v140
    %vm142 = vcmask 3072
    %143 = vst.msk [vmem:[#allocation2] sm:$0xf] %vm142, %v141
    %vm144 = vcmask 52256
    %v145 = vsel %vm144, %v124, inf
    %146 = vmin.xlane.f32.xlu0 %v145
    %v147 = vpop.xlane.xlu0 %146
    %vm148 = vcmp.le.f32.partialorder %v124, %v147
    %150 = vrot.lane.b32.xlu0 %v135, 4
    %v151 = vpop.permute.xlu0 %150
    %v153 = vsel %vm148, %v151, 1e+09
    %v154 = vsel %vm144, %v153, inf
    %155 = vmin.xlane.f32.xlu0 %v154
    %v156 = vpop.xlane.xlu0 %155
    %v157 = vcvt.f32.s32.to.zero.pseudo %v156
    %vm158 = vcmask 11272
    %159 = vst.msk [vmem:[#allocation2] sm:$0xf] %vm158, %v157
    %vm160 = vcmask 93240
    %v161 = vsel %vm160, %v124, inf
    %162 = vmin.xlane.f32.xlu0 %v161
    %v163 = vpop.xlane.xlu0 %162
    %vm164 = vcmp.le.f32.partialorder %v124, %v163
    %165 = vrot.lane.b32.xlu0 %v135, 7
    %v166 = vpop.permute.xlu0 %165
    %v168 = vsel %vm164, %v166, 1e+09
    %v169 = vsel %vm160, %v168, inf
    %170 = vmin.xlane.f32.xlu0 %v169
    %v171 = vpop.xlane.xlu0 %170
    %v172 = vcvt.f32.s32.to.zero.pseudo %v171
    %vm173 = vcmask 19472
    %174 = vst.msk [vmem:[#allocation2] sm:$0xf] %vm173, %v172
    %vm175 = vcmask 126048
    %v176 = vsel %vm175, %v124, inf
    %177 = vmin.xlane.f32.xlu0 %v176
    %v178 = vpop.xlane.xlu0 %177
    %vm179 = vcmp.le.f32.partialorder %v124, %v178
    %180 = vrot.lane.b32.xlu0 %v135, 12
    %v181 = vpop.permute.xlu0 %180
    %v183 = vsel %vm179, %v181, 1e+09
    %v184 = vsel %vm175, %v183, inf
    %185 = vmin.xlane.f32.xlu0 %v184
    %v186 = vpop.xlane.xlu0 %185
    %v187 = vcvt.f32.s32.to.zero.pseudo %v186
    %vm188 = vcmask 27672
    %189 = vst.msk [vmem:[#allocation2] sm:$0xf] %vm188, %v187
    %vm190 = vcmask 150656
    %v191 = vsel %vm190, %v124, inf
    %192 = vmin.xlane.f32.xlu0 %v191
    %v193 = vpop.xlane.xlu0 %192
    %vm194 = vcmp.le.f32.partialorder %v124, %v193
    %195 = vrot.lane.b32.xlu0 %v135, 16
    %v196 = vpop.permute.xlu0 %195
    %v198 = vsel %vm194, %v196, 1e+09
    %v199 = vsel %vm190, %v198, inf
    %200 = vmin.xlane.f32.xlu0 %v199
    %v201 = vpop.xlane.xlu0 %200
    %v202 = vcvt.f32.s32.to.zero.pseudo %v201
    %vm203 = vcmask 35872
    %204 = vst.msk [vmem:[#allocation2] sm:$0xf] %vm203, %v202
    %vm205 = vcmask 191640
    %v206 = vsel %vm205, %v124, inf
    %207 = vmin.xlane.f32.xlu0 %v206
    %v208 = vpop.xlane.xlu0 %207
    %vm209 = vcmp.le.f32.partialorder %v124, %v208
    %210 = vrot.lane.b32.xlu0 %v135, 19
    %v211 = vpop.permute.xlu0 %210
    %v213 = vsel %vm209, %v211, 1e+09
    %v214 = vsel %vm205, %v213, inf
    %215 = vmin.xlane.f32.xlu0 %v214
    %v216 = vpop.xlane.xlu0 %215
    %v217 = vcvt.f32.s32.to.zero.pseudo %v216
    %vm218 = vcmask 44072
    %219 = vst.msk [vmem:[#allocation2] sm:$0xf] %vm218, %v217
    %vm220 = vcmask 224448
    %v221 = vsel %vm220, %v124, inf
    %222 = vmin.xlane.f32.xlu0 %v221
    %v223 = vpop.xlane.xlu0 %222
    %vm224 = vcmp.le.f32.partialorder %v124, %v223
    %225 = vrot.lane.b32.xlu0 %v135, 24
    %v226 = vpop.permute.xlu0 %225
    %v228 = vsel %vm224, %v226, 1e+09
    %v229 = vsel %vm220, %v228, inf
    %230 = vmin.xlane.f32.xlu0 %v229
    %v231 = vpop.xlane.xlu0 %230
    %v232 = vcvt.f32.s32.to.zero.pseudo %v231
    %vm233 = vcmask 52272
    %234 = vst.msk [vmem:[#allocation2] sm:$0xf] %vm233, %v232
    %vm235 = vcmask 249056
    %v236 = vsel %vm235, %v124, inf
    %237 = vmin.xlane.f32.xlu0 %v236
    %v238 = vpop.xlane.xlu0 %237
    %vm239 = vcmp.le.f32.partialorder %v124, %v238
    %240 = vrot.lane.b32.xlu0 %v135, 28
    %v241 = vpop.permute.xlu0 %240
    %v243 = vsel %vm239, %v241, 1e+09
    %v244 = vsel %vm235, %v243, inf
    %245 = vmin.xlane.f32.xlu0 %v244
    %v246 = vpop.xlane.xlu0 %245
    %v247 = vcvt.f32.s32.to.zero.pseudo %v246
    %vm248 = vcmask 60472
    %249 = vst.msk [vmem:[#allocation2] sm:$0xf] %vm248, %v247
    %vm250 = vcmask 290040
    %v251 = vsel %vm250, %v124, inf
    %252 = vmin.xlane.f32.xlu0 %v251
    %v253 = vpop.xlane.xlu0 %252
    %vm254 = vcmp.le.f32.partialorder %v124, %v253
    %255 = vrot.lane.b32.xlu0 %v135, 31
    %v256 = vpop.permute.xlu0 %255
    %v258 = vsel %vm254, %v256, 1e+09
    %v259 = vsel %vm250, %v258, inf
    %260 = vmin.xlane.f32.xlu0 %v259
    %v261 = vpop.xlane.xlu0 %260
    %v262 = vcvt.f32.s32.to.zero.pseudo %v261
    %vm263 = vcmask 68672
    %264 = vst.msk [vmem:[#allocation2] sm:$0xf] %vm263, %v262
    %vm265 = vcmask 322848
    %v266 = vsel %vm265, %v124, inf
    %267 = vmin.xlane.f32.xlu0 %v266
    %v268 = vpop.xlane.xlu0 %267
    %vm269 = vcmp.le.f32.partialorder %v124, %v268
    %270 = vrot.lane.b32.xlu0 %v135, 36
    %v271 = vpop.permute.xlu0 %270
    %v273 = vsel %vm269, %v271, 1e+09
    %v274 = vsel %vm265, %v273, inf
    %275 = vmin.xlane.f32.xlu0 %v274
    %v276 = vpop.xlane.xlu0 %275
    %v277 = vcvt.f32.s32.to.zero.pseudo %v276
    %vm278 = vcmask 76872
    %279 = vst.msk [vmem:[#allocation2] sm:$0xf] %vm278, %v277
    %vm280 = vcmask 347456
    %v281 = vsel %vm280, %v124, inf
    %282 = vmin.xlane.f32.xlu0 %v281
    %v283 = vpop.xlane.xlu0 %282
    %vm284 = vcmp.le.f32.partialorder %v124, %v283
    %285 = vrot.lane.b32.xlu0 %v135, 40
    %v286 = vpop.permute.xlu0 %285
    %v288 = vsel %vm284, %v286, 1e+09
    %v289 = vsel %vm280, %v288, inf
    %290 = vmin.xlane.f32.xlu0 %v289
    %v291 = vpop.xlane.xlu0 %290
    %v292 = vcvt.f32.s32.to.zero.pseudo %v291
    %vm293 = vcmask 85072
    %294 = vst.msk [vmem:[#allocation2] sm:$0xf] %vm293, %v292
    %vm295 = vcmask 388440
    %v296 = vsel %vm295, %v124, inf
    %297 = vmin.xlane.f32.xlu0 %v296
    %v298 = vpop.xlane.xlu0 %297
    %vm299 = vcmp.le.f32.partialorder %v124, %v298
    %300 = vrot.lane.b32.xlu0 %v135, 43
    %v301 = vpop.permute.xlu0 %300
    %v303 = vsel %vm299, %v301, 1e+09
    %v304 = vsel %vm295, %v303, inf
    %305 = vmin.xlane.f32.xlu0 %v304
    %v306 = vpop.xlane.xlu0 %305
    %v307 = vcvt.f32.s32.to.zero.pseudo %v306
    %vm308 = vcmask 93272
    %309 = vst.msk [vmem:[#allocation2] sm:$0xf] %vm308, %v307
    // Predicated region
    $region14: #{tpu_custom_call.1} parent=1 // pred_check
      _
    $region15: #{tpu_custom_call.1} parent=1 // pred_check_branch
      %311 = sbr.rel (0) target = $region17
    $region16: #{tpu_custom_call.1} parent=1 // pred_region
      %s313 = ssub.s32 64, 64
      %314 = vsyncadd [#allocation3], %s313
      %s316 = sshll.u32 [#allocation2], 4
      %s317 = int_to_ptr.vmem [resolvable:$true] %s316
      %319 = dma.vmem_to_hbm [thread:$0]  %s317, 64, %s3, [#allocation3]
    $region17: #{tpu_custom_call.1} parent=1 // pred_fallthru
      _
    // Predicated region
    $region18: #{tpu_custom_call.1} parent=1 // pred_check
      _
    $region19: #{tpu_custom_call.1} parent=1 // pred_check_branch
      %321 = sbr.rel (0) target = $region21
    $region20: #{tpu_custom_call.1} parent=1 // pred_region
      %322 = dma.done [#allocation3], 64
    $region21: #{tpu_custom_call.1} parent=1 // pred_fallthru
      _
    %323 = vsyncpa [#allocation3], 1

</llo_original>
